<compile_context>
chip_gen: v6e
topology: v6e:2x2x1
jax: 0.10.0
libtpu: 0.0.40
codegen_flags: <defaults>
</compile_context>

<pallas_src>
import functools
from typing import NamedTuple, Optional

import jax
import jax.numpy as jnp
from jax.experimental import pallas as pl
from jax.experimental.pallas import tpu as pltpu


# ---------------------------------------------------------------------------
# Kernels
# ---------------------------------------------------------------------------
def _packed_kernel(x_ref, w_ref, b_ref, o_ref):
    """Packed non-leaky: thr folded into x via zero-padded block-diag weight."""
    x = x_ref[...]
    thr = jnp.dot(x, w_ref[...], preferred_element_type=jnp.float32) + b_ref[...]
    o_ref[...] = jnp.where(x > thr, x, thr).astype(o_ref.dtype)


def _packed_leaky_kernel(x_ref, w_ref, b_ref, o_ref):
    """Packed leaky: one fused (Dp, 2*Dp) matmul -> [thr | alphas]."""
    x = x_ref[...]
    ta = jnp.dot(x, w_ref[...], preferred_element_type=jnp.float32) + b_ref[...]
    dp = x.shape[-1]
    thr = ta[:, :dp]
    alphas = ta[:, dp:]
    o_ref[...] = jnp.where(x > thr, x, alphas * x + thr).astype(o_ref.dtype)


def _general_kernel(x_ref, t_ref, w_ref, b_ref, o_ref):
    """General non-leaky: separate `times` operand (D not packable to 128)."""
    x = x_ref[...]
    thr = jnp.dot(t_ref[...], w_ref[...],
                  preferred_element_type=jnp.float32) + b_ref[...]
    o_ref[...] = jnp.where(x > thr, x, thr).astype(o_ref.dtype)


def _general_leaky_kernel(x_ref, t_ref, wt_ref, bt_ref, wa_ref, ba_ref, o_ref):
    x = x_ref[...]
    t = t_ref[...]
    thr = jnp.dot(t, wt_ref[...], preferred_element_type=jnp.float32) + bt_ref[...]
    alphas = jnp.dot(t, wa_ref[...], preferred_element_type=jnp.float32) + ba_ref[...]
    o_ref[...] = jnp.where(x > thr, x, alphas * x + thr).astype(o_ref.dtype)


# ---------------------------------------------------------------------------
# Generation-aware tiling / semantics helpers
# ---------------------------------------------------------------------------
@functools.lru_cache(maxsize=None)
def _vmem_plan():
    """Returns (x-tile target bytes, scoped-VMEM limit bytes) per generation."""
    cap = None
    try:
        cap = pltpu.get_tpu_info().vmem_capacity_bytes
    except Exception:
        cap = None
    if cap is None:
        try:
            kind = jax.devices()[0].device_kind.lower()
        except Exception:
            kind = ""
        cap = (64 * 1024 * 1024 if ("v7" in kind or "7x" in kind)
               else 128 * 1024 * 1024)
    if cap >= 100 * 1024 * 1024:                 # v5e / v6e: 128 MiB VMEM
        return 8 * 1024 * 1024, 48 * 1024 * 1024
    return 4 * 1024 * 1024, 28 * 1024 * 1024     # v7x: 64 MiB / 32 MiB scoped


_GRID_SEMANTICS = None   # lazily resolved: CORE_PARALLEL on v7x, else PARALLEL


def _resolve_semantics():
    global _GRID_SEMANTICS
    if _GRID_SEMANTICS is None:
        try:
            kind = jax.devices()[0].device_kind.lower()
        except Exception:
            kind = ""
        multi_core = ("v7" in kind) or ("7x" in kind)
        _GRID_SEMANTICS = pltpu.CORE_PARALLEL if multi_core else pltpu.PARALLEL
    return _GRID_SEMANTICS


def _round_up(n, m):
    return -(-n // m) * m


def _pick_tile_rows(rows, row_bytes, target_bytes):
    """Largest multiple-of-8 row count with tile <= target_bytes, but kept
    small enough that the grid has >= 2 steps when possible (double-buffering
    overlap, and a 2-TC chip can split the batch)."""
    tile = max(8, (target_bytes // max(row_bytes, 1)) // 8 * 8)
    if rows > 8:
        half = _round_up(rows, 2) // 2
        tile = min(tile, _round_up(half, 8))
    if tile >= rows:
        return rows
    return tile


def _pallas_run(kernel, args, grid, in_specs, out_spec, out_shape, dtype,
                vmem_limit, cost):
    """Build + invoke the pallas_call; falls back from CORE_PARALLEL to
    PARALLEL if the backend rejects it."""
    global _GRID_SEMANTICS

    def build(sem):
        return pl.pallas_call(
            kernel,
            out_shape=jax.ShapeDtypeStruct(out_shape, dtype),
            grid=grid,
            in_specs=in_specs,
            out_specs=out_spec,
            compiler_params=pltpu.CompilerParams(
                dimension_semantics=(sem,),
                vmem_limit_bytes=vmem_limit),
            cost_estimate=cost,
        )

    sem = _resolve_semantics()
    try:
        return build(sem)(*args)
    except Exception:
        if sem is pltpu.PARALLEL:
            raise
        _GRID_SEMANTICS = pltpu.PARALLEL
        return build(pltpu.PARALLEL)(*args)


# ---------------------------------------------------------------------------
# Parameter preparation (done ONCE per parameter set) and forward wrapper
# ---------------------------------------------------------------------------
class TimeReLUParams(NamedTuple):
    leaky: bool
    time_dim: int
    data_dim: int
    packed: bool
    pack: int                              # P = 128 // D (1 if not packed)
    w: jax.Array                           # packed: (128, 128|256); else (T, D)
    b: jax.Array                           # packed: (1, 128|256);   else (1, D)
    w_alpha: Optional[jax.Array] = None    # general leaky path only
    b_alpha: Optional[jax.Array] = None


def prepare_time_relu(w_thr, b_thr, w_alpha=None, b_alpha=None, *,
                      time_dim, leaky):
    """Pack / pad / fuse the TimeReLU parameters (input-independent work).

    w_thr:   (T, D) float32 -- transpose of nn.Linear(T, D).weight
    b_thr:   (1, D) float32
    w_alpha: (T, D) float32 (only when leaky=True)
    b_alpha: (1, D) float32
    """
    T = time_dim
    D = w_thr.shape[1]
    assert T <= D
    assert w_thr.shape == (T, D) and b_thr.shape == (1, D)
    if leaky:
        assert w_alpha is not None and b_alpha is not None
        assert w_alpha.shape == (T, D) and b_alpha.shape == (1, D)

    packed = (D <= 128) and (128 % D == 0)
    if not packed:
        # General path: separate `times` operand inside the kernel.
        return TimeReLUParams(leaky, T, D, False, 1, w_thr, b_thr,
                              w_alpha if leaky else None,
                              b_alpha if leaky else None)

    P = 128 // D
    eye = jnp.eye(P, dtype=w_thr.dtype)
    # Fold the `times = x[:, -T:]` slice into the weight: zero-pad the input
    # (K) dim from T to D (only the last T rows are non-zero), then make it
    # block-diagonal over the P logical rows packed into one physical row.
    wt = jnp.zeros((D, D), w_thr.dtype).at[D - T:, :].set(w_thr)
    wt = jnp.kron(eye, wt)                                    # (128, 128)
    bt = jnp.tile(b_thr, (1, P))                              # (1, 128)
    if leaky:
        wa = jnp.zeros((D, D), w_alpha.dtype).at[D - T:, :].set(w_alpha)
        wa = jnp.kron(eye, wa)
        ba = jnp.tile(b_alpha, (1, P))
        w = jnp.concatenate([wt, wa], axis=1)                 # (128, 256)
        b = jnp.concatenate([bt, ba], axis=1)                 # (1, 256)
    else:
        w, b = wt, bt
    return TimeReLUParams(leaky, T, D, True, P, w, b, None, None)


def time_relu(params: TimeReLUParams, x):
    """TimeReLU forward. x: (B, D) float32."""
    assert x.dtype == jnp.float32, "kernel tiling assumes float32 inputs"
    B, D = x.shape
    assert D == params.data_dim
    itemsize = x.dtype.itemsize
    tile_target, vmem_limit = _vmem_plan()

    if params.packed:
        P = params.pack
        pad = (-B) % P
        xin = jnp.pad(x, ((0, pad), (0, 0))) if pad else x
        Bp = (B + pad) // P
        Dp = P * D                                # == 128
        xp = xin.reshape(Bp, Dp)                  # free row-major reshape

        tile_b = _pick_tile_rows(Bp, Dp * itemsize, tile_target)
        grid = (pl.cdiv(Bp, tile_b),)
        row_spec = pl.BlockSpec((tile_b, Dp), lambda i: (i, 0))
        in_specs = [row_spec,
                    pl.BlockSpec(params.w.shape, lambda i: (0, 0)),
                    pl.BlockSpec(params.b.shape, lambda i: (0, 0))]
        kernel = _packed_leaky_kernel if params.leaky else _packed_kernel
        args = (xp, params.w, params.b)

        cost = pl.CostEstimate(
            flops=2 * Bp * Dp * int(params.w.shape[1]),
            transcendentals=0,
            bytes_accessed=int(itemsize * (2 * Bp * Dp
                                           + grid[0] * (params.w.size
                                                        + params.b.size))))
        out_p = _pallas_run(kernel, args, grid, in_specs, row_spec,
                            (Bp, Dp), x.dtype, vmem_limit, cost)
        return out_p.reshape(B + pad, D)[:B]

    # ---- General path (D not packable into 128 lanes) ----
    T = params.time_dim
    times = x[:, -T:]
    tile_b = _pick_tile_rows(B, D * itemsize, tile_target)
    grid = (pl.cdiv(B, tile_b),)
    x_spec = pl.BlockSpec((tile_b, D), lambda i: (i, 0))
    t_spec = pl.BlockSpec((tile_b, T), lambda i: (i, 0))
    w_spec = pl.BlockSpec((T, D), lambda i: (0, 0))
    b_spec = pl.BlockSpec((1, D), lambda i: (0, 0))
    if params.leaky:
        kernel = _general_leaky_kernel
        in_specs = [x_spec, t_spec, w_spec, b_spec, w_spec, b_spec]
        args = (x, times, params.w, params.b, params.w_alpha, params.b_alpha)
        flops = 4 * B * T * D
        wbytes = 2 * (T * D + D)
    else:
        kernel = _general_kernel
        in_specs = [x_spec, t_spec, w_spec, b_spec]
        args = (x, times, params.w, params.b)
        flops = 2 * B * T * D
        wbytes = T * D + D
    cost = pl.CostEstimate(
        flops=flops, transcendentals=0,
        bytes_accessed=int(itemsize * (2 * B * D + B * T + grid[0] * wbytes)))
    return _pallas_run(kernel, args, grid, in_specs, x_spec,
                       (B, D), x.dtype, vmem_limit, cost)


# ---------------------------------------------------------------------------
# Pure-JAX reference (matches the PyTorch forward exactly).
# ---------------------------------------------------------------------------
def _reference(x, w_thr, b_thr, w_alpha, b_alpha, *, time_dim, leaky):
    times = x[:, -time_dim:]
    thr = times @ w_thr + b_thr
    alphas = (times @ w_alpha + b_alpha) if leaky else 0.0
    return jnp.where(x > thr, x, alphas * x + thr)


# ---------------------------------------------------------------------------
# Demo / self-check
# ---------------------------------------------------------------------------
if __name__ == "__main__":
    key = jax.random.PRNGKey(0)
    ok = True

    def run_case(B, D, T):
        global ok
        keys = jax.random.split(jax.random.fold_in(key, B * 1000 + D), 5)
        x = jax.random.normal(keys[0], (B, D), dtype=jnp.float32)
        w_thr = jax.random.normal(keys[1], (T, D), dtype=jnp.float32) * 0.1
        b_thr = jax.random.normal(keys[2], (1, D), dtype=jnp.float32) * 0.1
        w_alpha = jax.random.normal(keys[3], (T, D), dtype=jnp.float32) * 0.1
        b_alpha = jax.random.normal(keys[4], (1, D), dtype=jnp.float32) * 0.1
        for leaky in (False, True):
            params = prepare_time_relu(w_thr, b_thr, w_alpha, b_alpha,
                                       time_dim=T, leaky=leaky)
            out = jax.block_until_ready(time_relu(params, x))
            ref = _reference(x, w_thr, b_thr, w_alpha, b_alpha,
                             time_dim=T, leaky=leaky)
            ok = ok and bool(jnp.allclose(out, ref, atol=1e-5, rtol=1e-5))

    # Packed fast path: data_shape=32, time_shape=8 (B=18 exercises the
    # pad-to-multiple-of-P batch padding; 4 logical rows per 128-lane row).
    run_case(B=18, D=32, T=8)
    # General fallback path: data_shape=192 (> 128, not lane-packable).
    run_case(B=16, D=192, T=8)

    print("KERNEL_OK" if ok else "KERNEL_MISMATCH")
</pallas_src>

<mosaic_0001>
module attributes {stable_mosaic.version = 11 : i64} {
  func.func @_packed_kernel(%arg0: i32, %arg1: memref<5x128xf32, #tpu.memory_space<vmem>>, %arg2: memref<128x128xf32, #tpu.memory_space<vmem>>, %arg3: memref<1x128xf32, #tpu.memory_space<vmem>>, %arg4: memref<5x128xf32, #tpu.memory_space<vmem>>) attributes {dimension_semantics = [#tpu.dimension_semantics<parallel>], iteration_bounds = array<i64: 1>, scalar_prefetch = 0 : i64, scratch_operands = 0 : i64, tpu.core_type = #tpu.core_type<tc>, window_params = [{transform_indices = @transform_0, window_bounds = array<i64: 5, 128>}, {pipeline_mode = #tpu.pipeline_mode<synchronous>, transform_indices = @transform_1, window_bounds = array<i64: 128, 128>}, {pipeline_mode = #tpu.pipeline_mode<synchronous>, transform_indices = @transform_2, window_bounds = array<i64: 1, 128>}, {transform_indices = @transform_3, window_bounds = array<i64: 5, 128>}]} {
    %c0 = arith.constant 0 : index
    %c0_0 = arith.constant 0 : index
    %0 = vector.load %arg1[%c0, %c0_0] : memref<5x128xf32, #tpu.memory_space<vmem>>, vector<5x128xf32>
    %c0_1 = arith.constant 0 : index
    %c0_2 = arith.constant 0 : index
    %1 = vector.load %arg2[%c0_1, %c0_2] : memref<128x128xf32, #tpu.memory_space<vmem>>, vector<128x128xf32>
    %cst = arith.constant dense<0.000000e+00> : vector<5x128xf32>
    %2 = tpu.matmul %0, %1, %cst {dimension_numbers = #tpu.dot_dimension_numbers<[1], [0], [0], [1], [0, 0, 1, 1], [], []>} : vector<5x128xf32>, vector<128x128xf32>, vector<5x128xf32> -> vector<5x128xf32>
    %c0_3 = arith.constant 0 : index
    %c0_4 = arith.constant 0 : index
    %3 = vector.load %arg3[%c0_3, %c0_4] : memref<1x128xf32, #tpu.memory_space<vmem>>, vector<1x128xf32>
    %4 = vector.broadcast %3 : vector<1x128xf32> to vector<5x128xf32>
    %5 = arith.addf %2, %4 : vector<5x128xf32>
    %6 = arith.cmpf ogt, %0, %5 : vector<5x128xf32>
    %7 = arith.select %6, %0, %5 : vector<5x128xi1>, vector<5x128xf32>
    %c0_5 = arith.constant 0 : index
    %c0_6 = arith.constant 0 : index
    %8 = vector.load %arg4[%c0_5, %c0_6] : memref<5x128xf32, #tpu.memory_space<vmem>>, vector<5x128xf32>
    tpu.vector_store %arg4[%c0_5, %c0_6], %7 {strides = array<i32>} : memref<5x128xf32, #tpu.memory_space<vmem>>, vector<5x128xf32>,
    return
  }
  func.func @transform_0(%arg0: i32) -> (i32, i32) {
    %c0_i32 = arith.constant 0 : i32
    %c0_i32_0 = arith.constant 0 : i32
    return %arg0, %c0_i32 : i32, i32
  }
  func.func @transform_1(%arg0: i32) -> (i32, i32) {
    %c0_i32 = arith.constant 0 : i32
    %c0_i32_0 = arith.constant 0 : i32
    %c0_i32_1 = arith.constant 0 : i32
    return %c0_i32, %c0_i32_0 : i32, i32
  }
  func.func @transform_2(%arg0: i32) -> (i32, i32) {
    %c0_i32 = arith.constant 0 : i32
    %c0_i32_0 = arith.constant 0 : i32
    %c0_i32_1 = arith.constant 0 : i32
    return %c0_i32, %c0_i32_0 : i32, i32
  }
  func.func @transform_3(%arg0: i32) -> (i32, i32) {
    %c0_i32 = arith.constant 0 : i32
    %c0_i32_0 = arith.constant 0 : i32
    return %arg0, %c0_i32 : i32, i32
  }
}

</mosaic_0001>

<llo_original>
// kernel: tpu_custom_call.1
$region0: #{tpu_custom_call.1}
  #allocation0 [shape = 'u32[]', space=smem, size = 0x4, offset = 0x4, fixed_abs, tag = 'smem constant byte address 0x4 - core index']
  #allocation1 [shape = 'u32[144,128]{1,0:T(1,128)}', space=vmem, size = 0x12000, scoped, tag = 'internal scratch']
  %s0 = inlined_call_operand.hbm [shape: f32[5,128], index: 0, kind: input, shape index: {}]
  %s1 = inlined_call_operand.hbm [shape: f32[128,128], index: 1, kind: input, shape index: {}]
  %s2 = inlined_call_operand.vmem [shape: f32[1,128], index: 2, kind: input, shape index: {}]
  %s3 = inlined_call_operand.hbm [shape: f32[5,128], index: 3, kind: output, shape index: {}]
  %s4 = sld [smem:[#allocation0]]
  $region30: #{tpu_custom_call.1} parent=0
    _
  %s6 = ssub.s32 1, %s4
  %s7 = scalar_select 0, %s6, %s4
  $region1: #{tpu_custom_call.1} parent=0
    #allocation2 [shape = 'u8[4096]{0}', space=vmem, size = 0x1000, scoped, tag = 'input window, operand 0, single buffered']
    #allocation3 [shape = 's32[1]{0}', space=sflag, size = 0x4, scoped, tag = 'scoped memory for tpu_custom_call.1']
    #allocation4 [shape = 's32[1]{0}', space=sflag, size = 0x4, scoped, tag = 'scoped memory for tpu_custom_call.1']
    #allocation5 [shape = 'u8[65536]{0}', space=vmem, size = 0x10000, scoped, tag = 'input window, operand 1, single buffered']
    #allocation6 [shape = 's32[1]{0}', space=sflag, size = 0x4, scoped, tag = 'scoped memory for tpu_custom_call.1']
    #allocation7 [shape = 'u8[4096]{0}', space=vmem, size = 0x1000, scoped, tag = 'output window, operand 0, single buffered']
    %8 = vsyncpa [#allocation3], 0
    %9 = vsyncpa [#allocation6], 0
    %10 = vsyncpa [#allocation4], 0
    // Predicated region
    $region2: #{tpu_custom_call.1} parent=1 // pred_check
      _
    $region3: #{tpu_custom_call.1} parent=1 // pred_check_branch
      %12 = sbr.rel (0) target = $region5
    $region4: #{tpu_custom_call.1} parent=1 // pred_region
      %s14 = ssub.s32 128, 128
      %15 = vsyncadd [#allocation3], %s14
      %s17 = sshll.u32 [#allocation2], 4
      %s18 = int_to_ptr.vmem [resolvable:$true] %s17
      %20 = dma.hbm_to_vmem [thread:$0]  %s0, 128, %s18, [#allocation3]
    $region5: #{tpu_custom_call.1} parent=1 // pred_fallthru
      _
    // Predicated region
    $region6: #{tpu_custom_call.1} parent=1 // pred_check
      _
    $region7: #{tpu_custom_call.1} parent=1 // pred_check_branch
      %22 = sbr.rel (0) target = $region9
    $region8: #{tpu_custom_call.1} parent=1 // pred_region
      %s24 = ssub.s32 2048, 2048
      %25 = vsyncadd [#allocation6], %s24
      %s26 = sshll.u32 [#allocation5], 4
      %s27 = int_to_ptr.vmem [resolvable:$true] %s26
      %32 = dma.hbm_to_vmem [thread:$0]  %s1, 2048, %s27, [#allocation6], 128, 128, 8
    $region9: #{tpu_custom_call.1} parent=1 // pred_fallthru
      _
    // Predicated region
    $region10: #{tpu_custom_call.1} parent=1 // pred_check
      _
    $region11: #{tpu_custom_call.1} parent=1 // pred_check_branch
      %34 = sbr.rel (0) target = $region13
    $region12: #{tpu_custom_call.1} parent=1 // pred_region
      _
    $region13: #{tpu_custom_call.1} parent=1 // pred_fallthru
      _
    // Predicated region
    $region14: #{tpu_custom_call.1} parent=1 // pred_check
      _
    $region15: #{tpu_custom_call.1} parent=1 // pred_check_branch
      %36 = sbr.rel (0) target = $region17
    $region16: #{tpu_custom_call.1} parent=1 // pred_region
      %37 = dma.done [#allocation3], 128
    $region17: #{tpu_custom_call.1} parent=1 // pred_fallthru
      _
    // Predicated region
    $region18: #{tpu_custom_call.1} parent=1 // pred_check
      _
    $region19: #{tpu_custom_call.1} parent=1 // pred_check_branch
      %39 = sbr.rel (0) target = $region21
    $region20: #{tpu_custom_call.1} parent=1 // pred_region
      %40 = dma.done [#allocation6], 2048
    $region21: #{tpu_custom_call.1} parent=1 // pred_fallthru
      _
    %v41 = vld [vmem:[#allocation2] sm:$0x1f]
    %v42 = vld [vmem:[#allocation5] sm:$0xff]
    %v43 = vld [vmem:[#allocation5 + $0x8] sm:$0xff]
    %v44 = vld [vmem:[#allocation5 + $0x10] sm:$0xff]
    %v45 = vld [vmem:[#allocation5 + $0x18] sm:$0xff]
    %v46 = vld [vmem:[#allocation5 + $0x20] sm:$0xff]
    %v47 = vld [vmem:[#allocation5 + $0x28] sm:$0xff]
    %v48 = vld [vmem:[#allocation5 + $0x30] sm:$0xff]
    %v49 = vld [vmem:[#allocation5 + $0x38] sm:$0xff]
    %v50 = vld [vmem:[#allocation5 + $0x40] sm:$0xff]
    %v51 = vld [vmem:[#allocation5 + $0x48] sm:$0xff]
    %v52 = vld [vmem:[#allocation5 + $0x50] sm:$0xff]
    %v53 = vld [vmem:[#allocation5 + $0x58] sm:$0xff]
    %v54 = vld [vmem:[#allocation5 + $0x60] sm:$0xff]
    %v55 = vld [vmem:[#allocation5 + $0x68] sm:$0xff]
    %v56 = vld [vmem:[#allocation5 + $0x70] sm:$0xff]
    %v57 = vld [vmem:[#allocation5 + $0x78] sm:$0xff]
    %v58 = vld [vmem:[%s2] sm:$0x1]
    %v60 = vlaneseq
    %v61 = vshrl.u32 %v60, 7
    %v62 = vsub.s32 0, %v61
    %v63 = vrot.slane %v58, %v62
    %65 = vmatprep.subr.mxu0 0.0
    %66 = vmatpush1.msra.mxu0 %v57
    %67 = vmatprep.subr.mxu0 0.0
    %68 = vmatpush1.msra.mxu0 %v56
    %69 = vmatprep.subr.mxu0 0.0
    %70 = vmatpush1.msra.mxu0 %v55
    %71 = vmatprep.subr.mxu0 0.0
    %72 = vmatpush1.msra.mxu0 %v54
    %73 = vmatprep.subr.mxu0 0.0
    %74 = vmatpush1.msra.mxu0 %v53
    %75 = vmatprep.subr.mxu0 0.0
    %76 = vmatpush1.msra.mxu0 %v52
    %77 = vmatprep.subr.mxu0 0.0
    %78 = vmatpush1.msra.mxu0 %v51
    %79 = vmatprep.subr.mxu0 0.0
    %80 = vmatpush1.msra.mxu0 %v50
    %81 = vmatprep.subr.mxu0 0.0
    %82 = vmatpush1.msra.mxu0 %v49
    %83 = vmatprep.subr.mxu0 0.0
    %84 = vmatpush1.msra.mxu0 %v48
    %85 = vmatprep.subr.mxu0 0.0
    %86 = vmatpush1.msra.mxu0 %v47
    %87 = vmatprep.subr.mxu0 0.0
    %88 = vmatpush1.msra.mxu0 %v46
    %89 = vmatprep.subr.mxu0 0.0
    %90 = vmatpush1.msra.mxu0 %v45
    %91 = vmatprep.subr.mxu0 0.0
    %92 = vmatpush1.msra.mxu0 %v44
    %93 = vmatprep.subr.mxu0 0.0
    %94 = vmatpush1.msra.mxu0 %v43
    %95 = vmatprep.subr.mxu0 0.0
    %96 = vmatpush1.msra.mxu0 %v42
    %97 = vmatprep.subr.mxu0 0.0
    %98 = vmatpush2.msra.mxu0 0.0
    %99 = vmatprep.subr.mxu0 0.0
    %100 = vmatpush2.msra.mxu0 0.0
    %101 = vmatprep.subr.mxu0 0.0
    %102 = vmatpush2.msra.mxu0 0.0
    %103 = vmatprep.subr.mxu0 0.0
    %104 = vmatpush2.msra.mxu0 0.0
    %105 = vmatprep.subr.mxu0 0.0
    %106 = vmatpush2.msra.mxu0 0.0
    %107 = vmatprep.subr.mxu0 0.0
    %108 = vmatpush2.msra.mxu0 0.0
    %109 = vmatprep.subr.mxu0 0.0
    %110 = vmatpush2.msra.mxu0 0.0
    %111 = vmatprep.subr.mxu0 0.0
    %112 = vmatpush2.msra.mxu0 0.0
    %113 = vmatprep.subr.mxu0 0.0
    %114 = vmatpush2.msra.mxu0 0.0
    %115 = vmatprep.subr.mxu0 0.0
    %116 = vmatpush2.msra.mxu0 0.0
    %117 = vmatprep.subr.mxu0 0.0
    %118 = vmatpush2.msra.mxu0 0.0
    %119 = vmatprep.subr.mxu0 0.0
    %120 = vmatpush2.msra.mxu0 0.0
    %121 = vmatprep.subr.mxu0 0.0
    %122 = vmatpush2.msra.mxu0 0.0
    %123 = vmatprep.subr.mxu0 0.0
    %124 = vmatpush2.msra.mxu0 0.0
    %125 = vmatprep.subr.mxu0 0.0
    %126 = vmatpush2.msra.mxu0 0.0
    %127 = vmatprep.subr.mxu0 0.0
    %128 = vmatpush2.msra.mxu0 0.0
    %129 = vmatprep.mubr.f32.mxu0 0.0
    %130 = vmatmul.mubr.f32.gmra.mxu0 %v41
    %v131 = vpop.f32.mrf.mxu0
    %v132 = vadd.f32 %v63, %v131
    %v133 = vpop.f32.mrf.mxu0
    %134 = vdwg.mxu0
    %vm135 = vcmp.gt.f32.partialorder %v41, %v132
    %v136 = vsel %vm135, %v41, %v132
    %137 = vst [vmem:[#allocation7] sm:$0x1f] %v136
    // Predicated region
    $region22: #{tpu_custom_call.1} parent=1 // pred_check
      _
    $region23: #{tpu_custom_call.1} parent=1 // pred_check_branch
      %139 = sbr.rel (0) target = $region25
    $region24: #{tpu_custom_call.1} parent=1 // pred_region
      %s141 = ssub.s32 128, 128
      %142 = vsyncadd [#allocation4], %s141
      %s144 = sshll.u32 [#allocation7], 4
      %s145 = int_to_ptr.vmem [resolvable:$true] %s144
      %147 = dma.vmem_to_hbm [thread:$0]  %s145, 128, %s3, [#allocation4]
    $region25: #{tpu_custom_call.1} parent=1 // pred_fallthru
      _
    // Predicated region
    $region26: #{tpu_custom_call.1} parent=1 // pred_check
      _
    $region27: #{tpu_custom_call.1} parent=1 // pred_check_branch
      %149 = sbr.rel (0) target = $region29
    $region28: #{tpu_custom_call.1} parent=1 // pred_region
      %150 = dma.done [#allocation4], 128
    $region29: #{tpu_custom_call.1} parent=1 // pred_fallthru
      _
    %151 = vsyncpa [#allocation3], 1
    %152 = vsyncpa [#allocation6], 1
    %153 = vsyncpa [#allocation4], 1

</llo_original>
